<compile_context>
chip_gen: v6e
topology: v6e:2x2x1
jax: 0.10.0
libtpu: 0.0.40
codegen_flags: <defaults>
</compile_context>

<pallas_src>
import functools

import jax
import jax.numpy as jnp
from jax.experimental import pallas as pl
from jax.experimental.pallas import tpu as pltpu

EPS = 1e-5                      # BatchNorm2d / BatchNorm1d default eps
MAX_TILE = 2048                 # spatial lanes per tile (review: 1024-2048)
VMEM_LIMIT = 32 * 1024 * 1024   # explicit scoped-VMEM budget (safe on v5e/v6e/v7x)


# ----------------------------------------------------------------------------- helpers
def _choose_tile(hw, max_t=MAX_TILE):
    """Pick spatial tile T (multiple of 128) and padded spatial length (multiple of T)."""
    hw128 = -(-hw // 128) * 128
    if hw128 <= max_t:
        return hw128, hw128                       # single (possibly padded) tile
    top = max_t - max_t % 128
    for cand in range(top, 127, -128):            # exact divisor -> no padding
        if hw % cand == 0:
            return cand, hw
    best = None
    for cand in range(top, 127, -128):            # otherwise minimize padded length
        padded = -(-hw // cand) * cand
        if best is None or padded < best[1]:
            best = (cand, padded)
    return best


def _mish(y):
    """Mish in f32: y*tanh(softplus(y)) == y * t/(t+2) with t = e^y (e^y + 2)."""
    e = jnp.exp(jnp.minimum(y, 25.0))
    t = e * (e + 2.0)
    out = y * t * pl.reciprocal(t + 2.0, approx=True)
    return jnp.where(y > 20.0, y, out)   # mish(y) ~= y for large y


def _mish_jax(y):
    return y * jnp.tanh(jax.nn.softplus(y))


# -------------------------------------------- kernel 1: per-batch colsum + Gram matrix
def _stats_kernel(x_ref, colsum_ref, gram_ref):
    # x_ref: (1, C, T) input slab. Accumulates per-batch colsum(x) and Gram = x @ x^T
    # (contraction over the spatial tile -> real MXU work, no conv recompute).
    t = pl.program_id(1)

    @pl.when(t == 0)
    def _():
        colsum_ref[...] = jnp.zeros_like(colsum_ref)
        gram_ref[...] = jnp.zeros_like(gram_ref)

    xt = x_ref[0]                                                        # (C, T)
    colsum_ref[0] = colsum_ref[0] + jnp.sum(xt.astype(jnp.float32),
                                            axis=1, keepdims=True)
    xb = xt.astype(jnp.bfloat16)                                         # MXU operands
    gram_ref[0] = gram_ref[0] + jax.lax.dot_general(
        xb, xb, (((1,), (1,)), ((), ())), preferred_element_type=jnp.float32)


def input_stats(x3, tile):
    B, C, HWp = x3.shape
    nt = HWp // tile
    return pl.pallas_call(
        _stats_kernel,
        out_shape=(jax.ShapeDtypeStruct((B, C, 1), jnp.float32),
                   jax.ShapeDtypeStruct((B, C, C), jnp.float32)),
        grid_spec=pltpu.PrefetchScalarGridSpec(
            num_scalar_prefetch=0,
            grid=(B, nt),
            in_specs=[pl.BlockSpec((1, C, tile), lambda b, t: (b, 0, t))],
            out_specs=(pl.BlockSpec((1, C, 1), lambda b, t: (b, 0, 0)),
                       pl.BlockSpec((1, C, C), lambda b, t: (b, 0, 0)))),
        compiler_params=pltpu.CompilerParams(
            dimension_semantics=("parallel", "arbitrary"),   # megacore-friendly partials
            vmem_limit_bytes=VMEM_LIMIT),
    )(x3)


# -------------------------------------- kernel 2: fused conv1x1 + BN + Mish + Encoding
def _enc_fused_kernel(x_ref, w_ref, a_ref, bsh_ref, cw_ref, cwsq_ref, scale_ref,
                      enc_ref, asum_ref, *, valid_len):
    # x_ref:     (1, C, T)  input slab (channels on sublanes, spatial on lanes)
    # w_ref:     (C, C)     1x1 conv weight (Cout, Cin)
    # a_ref:     (C, 1)     folded BN scale  (gamma * rstd)
    # bsh_ref:   (C, 1)     folded BN shift  (beta - mean * gamma * rstd)
    # cw_ref:    (K, C)     codewords
    # cwsq_ref:  (K, 1)     ||codeword_k||^2
    # scale_ref: (K, 1)     per-code scale
    # enc_ref:   (1, K, C)  per-batch encoded features (accumulated across row tiles)
    # asum_ref:  (K, 1)     VMEM scratch: per-code sum of assignment weights
    t = pl.program_id(1)
    nt = pl.num_programs(1)

    @pl.when(t == 0)
    def _():
        enc_ref[...] = jnp.zeros_like(enc_ref)
        asum_ref[...] = jnp.zeros_like(asum_ref)

    xt = x_ref[0]                                                         # (C, T)
    w_bf = w_ref[...].astype(jnp.bfloat16)
    y = jnp.dot(w_bf, xt.astype(jnp.bfloat16),
                preferred_element_type=jnp.float32)                       # 1x1 conv
    z = _mish(y * a_ref[...] + bsh_ref[...])                              # BN + Mish, f32

    # scaled L2 logits:  scale_k * (||X_n||^2 - 2 cw_k.X_n + ||cw_k||^2)
    z_bf = z.astype(jnp.bfloat16)
    g = jnp.dot(cw_ref[...].astype(jnp.bfloat16), z_bf,
                preferred_element_type=jnp.float32)                       # (K, T)
    zsq = jnp.sum(z * z, axis=0, keepdims=True)                           # (1, T)
    logits = scale_ref[...] * (zsq - 2.0 * g + cwsq_ref[...])             # (K, T)

    # softmax over codes (sublane axis) — kept in f32 on the VPU/EUP
    m = jnp.max(logits, axis=0, keepdims=True)
    e = jnp.exp(logits - m)
    denom = jnp.sum(e, axis=0, keepdims=True)
    attn = e * pl.reciprocal(denom, approx=True)                          # (K, T)

    if valid_len is not None:   # zero the assignment weights on padded lanes
        T = attn.shape[1]
        pos = t * T + jax.lax.broadcasted_iota(jnp.int32, (1, T), 1)
        attn = jnp.where(pos < valid_len, attn, 0.0)

    # aggregate:  enc[k,c] = sum_n attn[k,n] * z[c,n]  -  (sum_n attn[k,n]) * cw[k,c]
    part = jax.lax.dot_general(attn.astype(jnp.bfloat16), z_bf,
                               (((1,), (1,)), ((), ())),
                               preferred_element_type=jnp.float32)        # (K, C)
    enc_ref[0] = enc_ref[0] + part           # accumulate form (v7x MRB-friendly)
    asum_ref[...] = asum_ref[...] + jnp.sum(attn, axis=1, keepdims=True)

    @pl.when(t == nt - 1)
    def _():
        enc_ref[0] = enc_ref[0] - asum_ref[...] * cw_ref[...]


def encode_fused(x3, w, a_col, b_col, cw, cwsq, scale_col, *, tile, valid_len=None):
    B, C, HWp = x3.shape
    K = cw.shape[0]
    nt = HWp // tile
    kernel = functools.partial(_enc_fused_kernel, valid_len=valid_len)
    return pl.pallas_call(
        kernel,
        out_shape=jax.ShapeDtypeStruct((B, K, C), jnp.float32),
        grid_spec=pltpu.PrefetchScalarGridSpec(
            num_scalar_prefetch=0,
            grid=(B, nt),
            in_specs=[pl.BlockSpec((1, C, tile), lambda b, t: (b, 0, t)),
                      pl.BlockSpec((C, C), lambda b, t: (0, 0)),
                      pl.BlockSpec((C, 1), lambda b, t: (0, 0)),
                      pl.BlockSpec((C, 1), lambda b, t: (0, 0)),
                      pl.BlockSpec((K, C), lambda b, t: (0, 0)),
                      pl.BlockSpec((K, 1), lambda b, t: (0, 0)),
                      pl.BlockSpec((K, 1), lambda b, t: (0, 0))],
            out_specs=pl.BlockSpec((1, K, C), lambda b, t: (b, 0, 0)),
            scratch_shapes=[pltpu.VMEM((K, 1), jnp.float32)]),
        compiler_params=pltpu.CompilerParams(
            dimension_semantics=("parallel", "arbitrary"),
            vmem_limit_bytes=VMEM_LIMIT),
    )(x3, w, a_col, b_col, cw, cwsq, scale_col)


# ---------------------------------------------------- kernel 3: Mish(x * (1 + gamma))
def _gate_mish_kernel(x_ref, g_ref, o_ref):
    # x_ref: (1, C, T), g_ref: (1, C, 1), o_ref: (1, C, T). Lane-dense stream.
    xf = x_ref[0].astype(jnp.float32)
    o_ref[0] = _mish(xf * (1.0 + g_ref[0])).astype(o_ref.dtype)


def gate_mish(x3, gamma, *, tile):
    B, C, HWp = x3.shape
    nt = HWp // tile
    g3 = gamma.reshape(B, C, 1).astype(jnp.float32)
    return pl.pallas_call(
        _gate_mish_kernel,
        out_shape=jax.ShapeDtypeStruct((B, C, HWp), x3.dtype),
        grid_spec=pltpu.PrefetchScalarGridSpec(
            num_scalar_prefetch=0,
            grid=(B, nt),
            in_specs=[pl.BlockSpec((1, C, tile), lambda b, t: (b, 0, t)),
                      pl.BlockSpec((1, C, 1), lambda b, t: (b, 0, 0))],
            out_specs=pl.BlockSpec((1, C, tile), lambda b, t: (b, 0, t))),
        compiler_params=pltpu.CompilerParams(
            dimension_semantics=("parallel", "parallel"),
            vmem_limit_bytes=VMEM_LIMIT),
    )(x3, g3)


# ------------------------------------------------------------------------------ module
class EncModulePallas:
    """Forward-only mirror of EncModule (training-mode batch statistics)."""

    def __init__(self, in_channels, num_codes, key, row_tile=MAX_TILE):
        C, K = in_channels, num_codes
        self.in_channels, self.num_codes = C, K
        self.row_tile = row_tile
        ks = jax.random.split(key, 7)
        lim = 1.0 / (C ** 0.5)
        std = 1.0 / ((K * C) ** 0.5)
        # conv1: 1x1, no bias -> (Cout, Cin)
        self.conv_w = jax.random.uniform(ks[0], (C, C), jnp.float32, -lim, lim)
        # BatchNorm affine params at init
        self.bn1_g = jnp.ones((C,), jnp.float32)
        self.bn1_b = jnp.zeros((C,), jnp.float32)
        self.bn2_g = jnp.ones((K,), jnp.float32)
        self.bn2_b = jnp.zeros((K,), jnp.float32)
        # Encoding params
        self.codewords = jax.random.uniform(ks[1], (K, C), jnp.float32, -std, std)
        self.scale = jax.random.uniform(ks[2], (K,), jnp.float32, -1.0, 0.0)
        # linear (C -> C) and linearForSELoss (C -> 2)
        self.lin_w = jax.random.uniform(ks[3], (C, C), jnp.float32, -lim, lim)
        self.lin_b = jax.random.uniform(ks[4], (C,), jnp.float32, -lim, lim)
        self.se_w = jax.random.uniform(ks[5], (2, C), jnp.float32, -lim, lim)
        self.se_b = jax.random.uniform(ks[6], (2,), jnp.float32, -lim, lim)

    def __call__(self, x):
        B, C, H, W = x.shape
        assert C == self.in_channels
        HW = H * W
        x3 = x.reshape(B, C, HW)                       # keep input dtype (no f32 upcast)

        T, hw_pad = _choose_tile(HW, self.row_tile)
        if hw_pad != HW:                               # pad spatial axis to a tile multiple
            x3p = jnp.pad(x3, ((0, 0), (0, 0), (0, hw_pad - HW)))
            valid_len = HW
        else:
            x3p, valid_len = x3, None

        # ---- pass 1: per-batch colsum + Gram; BN2d training stats derived in JAX
        colsum_b, gram_b = input_stats(x3p, T)         # (B,C,1), (B,C,C)
        n = jnp.float32(B * HW)
        S = jnp.sum(colsum_b, axis=0)                  # (C, 1)
        G = jnp.sum(gram_b, axis=0)                    # (C, C)
        Wc = self.conv_w
        xbar = S / n
        mean = Wc @ xbar                               # (C, 1)  == E[conv(x)]
        cov_x = G / n - xbar @ xbar.T
        var = jnp.maximum(jnp.einsum('ij,jk,ik->i', Wc, cov_x, Wc), 0.0)[:, None]
        rstd = jax.lax.rsqrt(var + EPS)
        a_col = self.bn1_g.reshape(C, 1) * rstd        # fold BN affine: y*a + b
        b_col = self.bn1_b.reshape(C, 1) - mean * a_col

        # ---- pass 2: fused conv + BN + Mish + Encoding -> (B, K, C), nothing else hits HBM
        cwsq = jnp.sum(self.codewords * self.codewords, axis=1, keepdims=True)  # (K, 1)
        scale_col = self.scale.reshape(-1, 1)                                    # (K, 1)
        encoded = encode_fused(x3p, self.conv_w, a_col, b_col,
                               self.codewords, cwsq, scale_col,
                               tile=T, valid_len=valid_len)                      # (B, K, C)

        # ---- tiny head (BatchNorm1d over codes + Mish + mean + linears): plain-JAX glue
        mu2 = jnp.mean(encoded, axis=(0, 2))
        var2 = jnp.mean((encoded - mu2[None, :, None]) ** 2, axis=(0, 2))  # two-pass var
        e = (encoded - mu2[None, :, None]) * jax.lax.rsqrt(var2 + EPS)[None, :, None]
        e = e * self.bn2_g[None, :, None] + self.bn2_b[None, :, None]
        e = _mish_jax(e)
        em = jnp.mean(e, axis=1)                                   # (B, C)
        gamma = jax.nn.sigmoid(em @ self.lin_w.T + self.lin_b)     # (B, C)
        se = em @ self.se_w.T + self.se_b                          # (B, 2)

        # ---- lane-dense elementwise tail: Mish(x + x*gamma)
        out0 = gate_mish(x3p, gamma, tile=T)[:, :, :HW].reshape(B, C, H, W)
        return [out0, se]


# ---------------------------------------------- plain-JAX reference (PyTorch semantics)
def _ref_forward(x, m):
    B, C, H, W = x.shape
    xf = x.astype(jnp.float32)
    y = jnp.einsum('oc,bchw->bohw', m.conv_w, xf)                         # 1x1 conv
    mu = jnp.mean(y, axis=(0, 2, 3))
    var = jnp.var(y, axis=(0, 2, 3))
    yn = (y - mu[None, :, None, None]) * jax.lax.rsqrt(var + EPS)[None, :, None, None]
    yn = yn * m.bn1_g[None, :, None, None] + m.bn1_b[None, :, None, None]
    z = _mish_jax(yn)
    X = z.reshape(B, C, H * W).transpose(0, 2, 1)                         # (B, N, C)
    diff = X[:, :, None, :] - m.codewords[None, None, :, :]               # (B, N, K, C)
    sl2 = m.scale[None, None, :] * jnp.sum(diff * diff, axis=3)           # (B, N, K)
    A = jax.nn.softmax(sl2, axis=2)
    enc = jnp.sum(A[..., None] * diff, axis=1)                            # (B, K, C)
    mu2 = jnp.mean(enc, axis=(0, 2))
    var2 = jnp.var(enc, axis=(0, 2))
    e = (enc - mu2[None, :, None]) * jax.lax.rsqrt(var2 + EPS)[None, :, None]
    e = e * m.bn2_g[None, :, None] + m.bn2_b[None, :, None]
    e = _mish_jax(e)
    em = jnp.mean(e, axis=1)
    gamma = jax.nn.sigmoid(em @ m.lin_w.T + m.lin_b)
    out0 = _mish_jax(xf + xf * gamma[:, :, None, None])
    out1 = em @ m.se_w.T + m.se_b
    return out0, out1


if __name__ == "__main__":
    key = jax.random.PRNGKey(0)
    kx, kp = jax.random.split(key)

    B, C, H, W = 2, 32, 16, 16      # small shapes; HW=256 -> single 256-lane tile
    num_codes = 32

    x = jax.random.normal(kx, (B, C, H, W), jnp.float32)
    model = EncModulePallas(in_channels=C, num_codes=num_codes, key=kp)

    out0, out1 = model(x)
    jax.block_until_ready(out0)
    jax.block_until_ready(out1)

    ref0, ref1 = _ref_forward(x, model)
    assert out0.shape == (B, C, H, W) and out1.shape == (B, 2)
    err0 = float(jnp.max(jnp.abs(out0 - ref0)))
    err1 = float(jnp.max(jnp.abs(out1 - ref1)))
    # bf16 MXU operands (per perf guidance) give ~0.5-1% intermediate error which the
    # sharply-scaled softmax / BN1d head amplifies slightly; tolerances sized for that.
    assert jnp.allclose(out0, ref0, rtol=3e-2, atol=3e-2), err0
    assert jnp.allclose(out1, ref1, rtol=5e-2, atol=5e-2), err1

    print("KERNEL_OK")
</pallas_src>

<mosaic_0001>
module attributes {stable_mosaic.version = 11 : i64} {
  func.func @_stats_kernel(%arg0: i32, %arg1: i32, %arg2: memref<1x32x256xf32, #tpu.memory_space<vmem>>, %arg3: memref<1x32x1xf32, #tpu.memory_space<vmem>>, %arg4: memref<1x32x32xf32, #tpu.memory_space<vmem>>) attributes {dimension_semantics = [#tpu.dimension_semantics<parallel>, #tpu.dimension_semantics<arbitrary>], iteration_bounds = array<i64: 2, 1>, scalar_prefetch = 0 : i64, scratch_operands = 0 : i64, tpu.core_type = #tpu.core_type<tc>, window_params = [{transform_indices = @transform_0, window_bounds = array<i64: 1, 32, 256>}, {transform_indices = @transform_1, window_bounds = array<i64: 1, 32, 1>}, {transform_indices = @transform_2, window_bounds = array<i64: 1, 32, 32>}]} {
    %c0_i32 = arith.constant 0 : i32
    %0 = arith.cmpi eq, %arg1, %c0_i32 : i32
    %1 = arith.extui %0 : i1 to i32
    %c0_i32_0 = arith.constant 0 : i32
    %2 = arith.cmpi ne, %1, %c0_i32_0 : i32
    scf.if %2 {
      %cst_16 = arith.constant 0.000000e+00 : f32
      %21 = vector.broadcast %cst_16 : f32 to vector<1x32x1xf32>
      %c0_17 = arith.constant 0 : index
      %c0_18 = arith.constant 0 : index
      %c0_19 = arith.constant 0 : index
      %22 = vector.load %arg3[%c0_17, %c0_18, %c0_19] : memref<1x32x1xf32, #tpu.memory_space<vmem>>, vector<1x32x1xf32>
      tpu.vector_store %arg3[%c0_17, %c0_18, %c0_19], %21 {strides = array<i32>} : memref<1x32x1xf32, #tpu.memory_space<vmem>>, vector<1x32x1xf32>,
      %cst_20 = arith.constant 0.000000e+00 : f32
      %23 = vector.broadcast %cst_20 : f32 to vector<1x32x32xf32>
      %c0_21 = arith.constant 0 : index
      %c0_22 = arith.constant 0 : index
      %c0_23 = arith.constant 0 : index
      %24 = vector.load %arg4[%c0_21, %c0_22, %c0_23] : memref<1x32x32xf32, #tpu.memory_space<vmem>>, vector<1x32x32xf32>
      tpu.vector_store %arg4[%c0_21, %c0_22, %c0_23], %23 {strides = array<i32>} : memref<1x32x32xf32, #tpu.memory_space<vmem>>, vector<1x32x32xf32>,
    } else {
    }
    %c0 = arith.constant 0 : index
    %c0_1 = arith.constant 0 : index
    %c0_2 = arith.constant 0 : index
    %3 = vector.load %arg2[%c0, %c0_1, %c0_2] : memref<1x32x256xf32, #tpu.memory_space<vmem>>, vector<1x32x256xf32>
    %4 = vector.shape_cast %3 : vector<1x32x256xf32> to vector<32x256xf32>
    %c0_3 = arith.constant 0 : index
    %c0_4 = arith.constant 0 : index
    %c0_5 = arith.constant 0 : index
    %5 = vector.load %arg3[%c0_3, %c0_4, %c0_5] : memref<1x32x1xf32, #tpu.memory_space<vmem>>, vector<1x32x1xf32>
    %6 = vector.shape_cast %5 : vector<1x32x1xf32> to vector<32x1xf32>
    %cst = arith.constant dense<0.000000e+00> : vector<32xf32>
    %7 = vector.multi_reduction <add>, %4, %cst [1] : vector<32x256xf32> to vector<32xf32>
    %8 = vector.shape_cast %7 : vector<32xf32> to vector<32x1xf32>
    %9 = arith.addf %6, %8 : vector<32x1xf32>
    %c0_6 = arith.constant 0 : index
    %c0_7 = arith.constant 0 : index
    %c0_8 = arith.constant 0 : index
    %10 = vector.load %arg3[%c0_6, %c0_7, %c0_8] : memref<1x32x1xf32, #tpu.memory_space<vmem>>, vector<1x32x1xf32>
    %11 = vector.shape_cast %10 : vector<1x32x1xf32> to vector<32x1xf32>
    %12 = vector.shape_cast %9 : vector<32x1xf32> to vector<1x32x1xf32>
    tpu.vector_store %arg3[%c0_6, %c0_7, %c0_8], %12 {strides = array<i32>} : memref<1x32x1xf32, #tpu.memory_space<vmem>>, vector<1x32x1xf32>,
    %13 = arith.truncf %4 : vector<32x256xf32> to vector<32x256xbf16>
    %c0_9 = arith.constant 0 : index
    %c0_10 = arith.constant 0 : index
    %c0_11 = arith.constant 0 : index
    %14 = vector.load %arg4[%c0_9, %c0_10, %c0_11] : memref<1x32x32xf32, #tpu.memory_space<vmem>>, vector<1x32x32xf32>
    %15 = vector.shape_cast %14 : vector<1x32x32xf32> to vector<32x32xf32>
    %cst_12 = arith.constant dense<0.000000e+00> : vector<32x32xf32>
    %16 = tpu.matmul %13, %13, %cst_12 {dimension_numbers = #tpu.dot_dimension_numbers<[1], [1], [0], [0], [0, 0, 1, 0], [], []>} : vector<32x256xbf16>, vector<32x256xbf16>, vector<32x32xf32> -> vector<32x32xf32>
    %17 = arith.addf %15, %16 : vector<32x32xf32>
    %c0_13 = arith.constant 0 : index
    %c0_14 = arith.constant 0 : index
    %c0_15 = arith.constant 0 : index
    %18 = vector.load %arg4[%c0_13, %c0_14, %c0_15] : memref<1x32x32xf32, #tpu.memory_space<vmem>>, vector<1x32x32xf32>
    %19 = vector.shape_cast %18 : vector<1x32x32xf32> to vector<32x32xf32>
    %20 = vector.shape_cast %17 : vector<32x32xf32> to vector<1x32x32xf32>
    tpu.vector_store %arg4[%c0_13, %c0_14, %c0_15], %20 {strides = array<i32>} : memref<1x32x32xf32, #tpu.memory_space<vmem>>, vector<1x32x32xf32>,
    return
  }
  func.func @transform_0(%arg0: i32, %arg1: i32) -> (i32, i32, i32) {
    %c0_i32 = arith.constant 0 : i32
    %c0_i32_0 = arith.constant 0 : i32
    return %arg0, %c0_i32, %arg1 : i32, i32, i32
  }
  func.func @transform_1(%arg0: i32, %arg1: i32) -> (i32, i32, i32) {
    %c0_i32 = arith.constant 0 : i32
    %c0_i32_0 = arith.constant 0 : i32
    %c0_i32_1 = arith.constant 0 : i32
    return %arg0, %c0_i32, %c0_i32_0 : i32, i32, i32
  }
  func.func @transform_2(%arg0: i32, %arg1: i32) -> (i32, i32, i32) {
    %c0_i32 = arith.constant 0 : i32
    %c0_i32_0 = arith.constant 0 : i32
    %c0_i32_1 = arith.constant 0 : i32
    return %arg0, %c0_i32, %c0_i32_0 : i32, i32, i32
  }
}

</mosaic_0001>

<llo_original>
// kernel: tpu_custom_call.1
$region0: #{tpu_custom_call.1}
  #allocation0 [shape = 'u32[]', space=smem, size = 0x4, offset = 0x4, fixed_abs, tag = 'smem constant byte address 0x4 - core index']
  #allocation1 [shape = 'u32[144,128]{1,0:T(1,128)}', space=vmem, size = 0x12000, scoped, tag = 'internal scratch']
  %s0 = inlined_call_operand.hbm [shape: f32[2,32,256], index: 0, kind: input, shape index: {}]
  %s1 = inlined_call_operand.vmem [shape: f32[2,32,1], index: 1, kind: output, shape index: {0}]
  %s2 = inlined_call_operand.hbm [shape: f32[2,32,32], index: 2, kind: output, shape index: {1}]
  %3 = xla_tuple %s1, %s2
  %s4 = sld [smem:[#allocation0]]
  $region53: #{tpu_custom_call.1} parent=0
    _
  %s6 = ssub.s32 1, %s4
  %s7 = scalar_select 0, %s6, %s4
  $region1: #{tpu_custom_call.1} parent=0
    #allocation2 [shape = 'u8[65536]{0}', space=vmem, size = 0x10000, scoped, tag = 'input window, operand 0']
    #allocation3 [shape = 's32[2]{0}', space=sflag, size = 0x8, scoped, tag = 'scoped memory for tpu_custom_call.1']
    #allocation4 [shape = 's32[2]{0}', space=sflag, size = 0x8, scoped, tag = 'scoped memory for tpu_custom_call.1']
    #allocation5 [shape = 'u8[32768]{0}', space=vmem, size = 0x8000, scoped, tag = 'output window, operand 1']
    %8 = vsyncpa [#allocation3], 0
    %s9 = scalar_lea.sflag [#allocation3], 1
    %10 = vsyncpa %s9, 0
    %11 = vsyncpa [#allocation4], 0
    %s12 = scalar_lea.sflag [#allocation4], 1
    %13 = vsyncpa %s12, 0
    loop: start=0, step=1, limit=4
    $region2: #{tpu_custom_call.1} parent=1 // loop_pre_header
      _
    $region3: #{tpu_custom_call.1} parent=1 // loop_header
      %s15 = sphi 0, %s19
      %p16 = scmp.ge.s32.totalorder %s15, 4
      %s22 = sphi 0, %s34
      %s23 = sphi 0, %s30
      %s24 = sphi 0, %s22
      %s25 = sphi 0, %s23
      %s26 = sphi 0, %s24
      %s27 = sphi 0, %s25
      %s39 = sphi 0, %s41
      %s42 = sphi 0, %s39
      %s43 = sphi 0, %s42
      %s59 = sphi 0, %s43
      %s65 = sphi 0, %s67
      %s68 = sphi 0, %s65
      %s69 = sphi 0, %s68
      %s85 = sphi 0, %s69
      %s91 = sphi 0, %s93
      %s94 = sphi 0, %s91
      %s95 = sphi 0, %s94
      %s111 = sphi 0, %s95
    $region4: #{tpu_custom_call.1} parent=1 // loop_header_branch
      %18 = sbr.rel (%p16) target = $region8
    $region5: #{tpu_custom_call.1} parent=1 // loop_body
      %s20 = ssub.s32 %s15, 1
      %s21 = ssub.s32 %s15, 2
      %s28 = sadd.s32 1, %s23
      %p29 = scmp.ge.s32.totalorder %s28, 1
      %s30 = scalar_select %p29, 0, %s28
      %s31 = sadd.s32 1, %s22
      %s32 = scalar_select %p29, %s31, %s22
      %p33 = scmp.ge.s32.totalorder %s32, 2
      %s34 = scalar_select %p33, 0, %s32
      %s35 = ssub.s32 %s22, %s34
      %s36 = ssub.s32 %s23, %s30
      %s37 = sor.u32 %s35, %s36
      %p38 = scmp.eq.s32.totalorder %s37, 0
      %s40 = sadd.s32 %s39, 1
      %s41 = scalar_select %p38, %s39, %s40
      %p44 = pneg %p38
      %p45 = scmp.eq.s32.totalorder %s15, 1
      %p46 = por %p44, %p45
      %p47 = scmp.ne.s32.totalorder %s39, %s42
      %p48 = scmp.eq.s32.totalorder %s15, 0
      %p49 = por %p47, %p48
      %p50 = scmp.ne.s32.totalorder %s39, %s42
      %p51 = scmp.eq.s32.totalorder %s20, 1
      %p52 = por %p50, %p51
      %p53 = scmp.ne.s32.totalorder %s42, %s43
      %p54 = scmp.eq.s32.totalorder %s20, 0
      %p55 = por %p53, %p54
      %p56 = scmp.ne.s32.totalorder %s42, %s43
      %p57 = scmp.eq.s32.totalorder %s21, 1
      %p58 = por %p56, %p57
      %p60 = scmp.ne.s32.totalorder %s43, %s59
      %p61 = scmp.eq.s32.totalorder %s21, 0
      %p62 = por %p60, %p61
      %s63 = ssub.s32 %s22, %s34
      %p64 = scmp.eq.s32.totalorder %s63, 0
      %s66 = sadd.s32 %s65, 1
      %s67 = scalar_select %p64, %s65, %s66
      %p70 = pneg %p64
      %p71 = scmp.eq.s32.totalorder %s15, 1
      %p72 = por %p70, %p71
      %p73 = scmp.ne.s32.totalorder %s65, %s68
      %p74 = scmp.eq.s32.totalorder %s15, 0
      %p75 = por %p73, %p74
      %p76 = scmp.ne.s32.totalorder %s65, %s68
      %p77 = scmp.eq.s32.totalorder %s20, 1
      %p78 = por %p76, %p77
      %p79 = scmp.ne.s32.totalorder %s68, %s69
      %p80 = scmp.eq.s32.totalorder %s20, 0
      %p81 = por %p79, %p80
      %p82 = scmp.ne.s32.totalorder %s68, %s69
      %p83 = scmp.eq.s32.totalorder %s21, 1
      %p84 = por %p82, %p83
      %p86 = scmp.ne.s32.totalorder %s69, %s85
      %p87 = scmp.eq.s32.totalorder %s21, 0
      %p88 = por %p86, %p87
      %s89 = ssub.s32 %s22, %s34
      %p90 = scmp.eq.s32.totalorder %s89, 0
      %s92 = sadd.s32 %s91, 1
      %s93 = scalar_select %p90, %s91, %s92
      %p96 = pneg %p90
      %p97 = scmp.eq.s32.totalorder %s15, 1
      %p98 = por %p96, %p97
      %p99 = scmp.ne.s32.totalorder %s91, %s94
      %p100 = scmp.eq.s32.totalorder %s15, 0
      %p101 = por %p99, %p100
      %p102 = scmp.ne.s32.totalorder %s91, %s94
      %p103 = scmp.eq.s32.totalorder %s20, 1
      %p104 = por %p102, %p103
      %p105 = scmp.ne.s32.totalorder %s94, %s95
      %p106 = scmp.eq.s32.totalorder %s20, 0
      %p107 = por %p105, %p106
      %p108 = scmp.ne.s32.totalorder %s94, %s95
      %p109 = scmp.eq.s32.totalorder %s21, 1
      %p110 = por %p108, %p109
      %p112 = scmp.ne.s32.totalorder %s95, %s111
      %p113 = scmp.eq.s32.totalorder %s21, 0
      %p114 = por %p112, %p113
      %p115 = scmp.le.s32.totalorder 1, %s15
      %p116 = scmp.lt.s32.totalorder %s15, 3
      %p117 = pnand %p115, %p116
      %p118 = pneg %p117
      // Predicated region
      $region9: #{tpu_custom_call.1} parent=5 // pred_check
        _
      $region10: #{tpu_custom_call.1} parent=5 // pred_check_branch
        %120 = sbr.rel (%p117) target = $region12
      $region11: #{tpu_custom_call.1} parent=5 // pred_region
        %s121 = ssub.s32 %s15, 1
      $region12: #{tpu_custom_call.1} parent=5 // pred_fallthru
        _
      %p122 = scmp.lt.s32.totalorder %s15, 2
      // Predicated region
      $region13: #{tpu_custom_call.1} parent=5 // pred_check
        %p123 = pneg %p122
      $region14: #{tpu_custom_call.1} parent=5 // pred_check_branch
        %125 = sbr.rel (%p123) target = $region16
      $region15: #{tpu_custom_call.1} parent=5 // pred_region
        // Predicated region
        $region17: #{tpu_custom_call.1} parent=15 // pred_check
          %p126 = pneg %p49
        $region18: #{tpu_custom_call.1} parent=15 // pred_check_branch
          %128 = sbr.rel (%p126) target = $region20
        $region19: #{tpu_custom_call.1} parent=15 // pred_region
          %s129 = sand.u32 %s39, 1
          %s130 = scalar_lea.sflag [#allocation3], %s129
          %s131 = sand.u32 %s39, 1
          %s132 = smul.addr %s131, 64
          %s133 = scalar_lea.vmem [#allocation2], %s132
          %s134 = smul.u32 2, %s23
          %s136 = ssub.s32 1024, 1024
          %137 = vsyncadd %s130, %s136
          %s138 = smul.addr %s22, 8
          %s139 = sadd.s32 %s134, %s138
          %s140 = smul.addr %s139, 128
          %s141 = scalar_lea.hbm %s0, %s140
          %s142 = sshll.u32 %s133, 4
          %s143 = int_to_ptr.vmem [resolvable:$true] %s142
          %148 = dma.hbm_to_vmem [thread:$0]  %s141, 1024, %s143, %s130, 256, 256, 16
        $region20: #{tpu_custom_call.1} parent=15 // pred_fallthru
          _
      $region16: #{tpu_custom_call.1} parent=5 // pred_fallthru
        _
      %p149 = scmp.le.s32.totalorder 1, %s15
      %p150 = scmp.lt.s32.totalorder %s15, 3
      %p151 = pnand %p149, %p150
      %p152 = pneg %p151
      // Predicated region
      $region21: #{tpu_custom_call.1} parent=5 // pred_check
        _
      $region22: #{tpu_custom_call.1} parent=5 // pred_check_branch
        %154 = sbr.rel (%p151) target = $region24
      $region23: #{tpu_custom_call.1} parent=5 // pred_region
        %s155 = ssub.s32 %s15, 1
        %s156 = sand.u32 %s42, 1
        %s157 = scalar_lea.sflag [#allocation3], %s156
        %s158 = sand.u32 %s42, 1
        %s159 = smul.addr %s158, 64
        %s160 = scalar_lea.vmem [#allocation2], %s159
        // Predicated region
        $region25: #{tpu_custom_call.1} parent=23 // pred_check
          %p161 = pneg %p55
        $region26: #{tpu_custom_call.1} parent=23 // pred_check_branch
          %163 = sbr.rel (%p161) target = $region28
        $region27: #{tpu_custom_call.1} parent=23 // pred_region
          %164 = dma.done %s157, 1024
        $region28: #{tpu_custom_call.1} parent=23 // pred_fallthru
          _
        %s165 = sand.u32 %s42, 1
        %s166 = scalar_lea.sflag [#allocation3], %s165
        %s167 = sand.u32 %s42, 1
        %s168 = smul.addr %s167, 64
        %s169 = scalar_lea.vmem [#allocation2], %s168
        %p170 = pneg %p55
        %p171 = pneg %p52
        %p172 = pneg %p81
        %p173 = pneg %p78
        %p174 = scmp.lt.s32.totalorder %s24, 1
        %s175 = scalar_select %p174, %s24, 1
        %s176 = smul.addr %s175, 4
        %s177 = smul.addr %s176, 8
        %s178 = scalar_lea.vmem %s1, %s177
        %p179 = pneg %p107
        %p180 = pneg %p104
        %s181 = sand.u32 %s94, 1
        %s182 = scalar_lea.sflag [#allocation4], %s181
        %s183 = sand.u32 %s94, 1
        %s184 = smul.addr %s183, 32
        %s185 = scalar_lea.vmem [#allocation5], %s184
        %s186 = smul.u32 2, %s25
        %p187 = scmp.lt.s32.totalorder %s24, 1
        %s188 = scalar_select %p187, %s24, 1
        %s189 = smul.addr %s188, 4
        %s190 = smul.addr %s189, 8
        %s191 = scalar_lea.vmem %s1, %s190
        %p193 = scmp.eq.s32.totalorder %s25, 0
        // Predicated region
        $region29: #{tpu_custom_call.1} parent=23 // pred_check
          %p194 = pneg %p193
        $region30: #{tpu_custom_call.1} parent=23 // pred_check_branch
          %196 = sbr.rel (%p194) target = $region32
        $region31: #{tpu_custom_call.1} parent=23 // pred_region
          %vm197 = vcmask 7168
          %198 = vst.msk [vmem:[%s191] sm:$0xff] %vm197, 0.0
          %199 = vst.msk [vmem:[%s191 + $0x8] sm:$0xff] %vm197, 0.0
          %200 = vst.msk [vmem:[%s191 + $0x10] sm:$0xff] %vm197, 0.0
          %201 = vst.msk [vmem:[%s191 + $0x18] sm:$0xff] %vm197, 0.0
          %vm202 = vcmask 261120
          %203 = vst.msk [vmem:[%s185] sm:$0xff] %vm202, 0.0
          %204 = vst.msk [vmem:[%s185 + $0x8] sm:$0xff] %vm202, 0.0
          %205 = vst.msk [vmem:[%s185 + $0x10] sm:$0xff] %vm202, 0.0
          %206 = vst.msk [vmem:[%s185 + $0x18] sm:$0xff] %vm202, 0.0
        $region32: #{tpu_custom_call.1} parent=23 // pred_fallthru
          _
        %v207 = vld [vmem:[%s160] sm:$0xff]
        %v208 = vld [vmem:[%s160 + $0x8] sm:$0xff]
        %v209 = vld [vmem:[%s160 + $0x10] sm:$0xff]
        %v210 = vld [vmem:[%s160 + $0x18] sm:$0xff]
        %v211 = vld [vmem:[%s160 + $0x20] sm:$0xff]
        %v212 = vld [vmem:[%s160 + $0x28] sm:$0xff]
        %v213 = vld [vmem:[%s160 + $0x30] sm:$0xff]
        %v214 = vld [vmem:[%s160 + $0x38] sm:$0xff]
        %v215 = vld [vmem:[%s191] sm:$0xff]
        %v216 = vld [vmem:[%s191 + $0x8] sm:$0xff]
        %v217 = vld [vmem:[%s191 + $0x10] sm:$0xff]
        %v218 = vld [vmem:[%s191 + $0x18] sm:$0xff]
        %v219 = vadd.f32 %v207, %v208
        %220 = vadd.xlane.f32.xlu0 %v219
        %v221 = vpop.xlane.xlu0 %220
        %v222 = vadd.f32 %v209, %v210
        %223 = vadd.xlane.f32.xlu0 %v222
        %v224 = vpop.xlane.xlu0 %223
        %v225 = vadd.f32 %v211, %v212
        %226 = vadd.xlane.f32.xlu0 %v225
        %v227 = vpop.xlane.xlu0 %226
        %v228 = vadd.f32 %v213, %v214
        %229 = vadd.xlane.f32.xlu0 %v228
        %v230 = vpop.xlane.xlu0 %229
        %v231 = vadd.f32 %v215, %v221
        %v232 = vadd.f32 %v216, %v224
        %v233 = vadd.f32 %v217, %v227
        %v234 = vadd.f32 %v218, %v230
        %vm235 = vcmask 7168
        %236 = vst.msk [vmem:[%s191] sm:$0xff] %vm235, %v231
        %237 = vst.msk [vmem:[%s191 + $0x8] sm:$0xff] %vm235, %v232
        %238 = vst.msk [vmem:[%s191 + $0x10] sm:$0xff] %vm235, %v233
        %239 = vst.msk [vmem:[%s191 + $0x18] sm:$0xff] %vm235, %v234
        %v240 = vpack.c.bf16 %v209, %v207
        %v241 = vpack.c.bf16 %v210, %v208
        %v242 = vpack.c.bf16 %v213, %v211
        %v243 = vpack.c.bf16 %v214, %v212
        %v244 = vld [vmem:[%s185] sm:$0xff]
        %v245 = vld [vmem:[%s185 + $0x8] sm:$0xff]
        %v246 = vld [vmem:[%s185 + $0x10] sm:$0xff]
        %v247 = vld [vmem:[%s185 + $0x18] sm:$0xff]
        %248 = vmatprep.subr.bf16.mxu0 0
        %249 = vmatpush1.bf16.xpose.msra.mxu0 0
        %250 = vmatprep.subr.bf16.mxu0 0
        %251 = vmatpush1.bf16.xpose.msra.mxu0 0
        %252 = vmatprep.subr.bf16.mxu0 0
        %253 = vmatpush1.bf16.xpose.msra.mxu0 0
        %254 = vmatprep.subr.bf16.mxu0 0
        %255 = vmatpush1.bf16.xpose.msra.mxu0 0
        %256 = vmatprep.subr.bf16.mxu0 0
        %257 = vmatpush1.bf16.xpose.msra.mxu0 0
        %258 = vmatprep.subr.bf16.mxu0 0
        %259 = vmatpush1.bf16.xpose.msra.mxu0 0
        %260 = vmatprep.subr.bf16.mxu0 %v243
        %261 = vmatpush1.bf16.xpose.msra.mxu0 %v242
        %262 = vmatprep.subr.bf16.mxu0 %v241
        %263 = vmatpush1.bf16.xpose.msra.mxu0 %v240
        %264 = vmatprep.subr.bf16.mxu0 0
        %265 = vmatpush2.bf16.xpose.msra.mxu0 0
        %266 = vmatprep.subr.bf16.mxu0 0
        %267 = vmatpush2.bf16.xpose.msra.mxu0 0
        %268 = vmatprep.subr.bf16.mxu0 0
        %269 = vmatpush2.bf16.xpose.msra.mxu0 0
        %270 = vmatprep.subr.bf16.mxu0 0
        %271 = vmatpush2.bf16.xpose.msra.mxu0 0
        %272 = vmatprep.subr.bf16.mxu0 0
        %273 = vmatpush2.bf16.xpose.msra.mxu0 0
        %274 = vmatprep.subr.bf16.mxu0 0
        %275 = vmatpush2.bf16.xpose.msra.mxu0 0
        %276 = vmatprep.subr.bf16.mxu0 0
        %277 = vmatpush2.bf16.xpose.msra.mxu0 0
        %278 = vmatprep.subr.bf16.mxu0 0
        %279 = vmatpush2.bf16.xpose.msra.mxu0 0
        %280 = vmatprep.mubr.bf16.mxu0 %v241
        %281 = vmatmul.mubr.bf16.gmra.mxu0 %v240
        %v282 = vpop.f32.mrf.mxu0
        %v283 = vadd.f32 0.0, %v282
        %v284 = vpop.f32.mrf.mxu0
        %v285 = vpop.f32.mrf.mxu0
        %v286 = vadd.f32 0.0, %v285
        %v287 = vpop.f32.mrf.mxu0
        %288 = vmatprep.mubr.bf16.mxu0 %v243
        %289 = vmatmul.mubr.bf16.gmra.mxu0 %v242
        %v290 = vpop.f32.mrf.mxu0
        %v291 = vadd.f32 0.0, %v290
        %v292 = vpop.f32.mrf.mxu0
        %v293 = vpop.f32.mrf.mxu0
        %v294 = vadd.f32 0.0, %v293
        %v295 = vpop.f32.mrf.mxu0
        %296 = vdwg.mxu0
        %v297 = vadd.f32 %v244, %v283
        %v298 = vadd.f32 %v245, %v286
        %v299 = vadd.f32 %v246, %v291
        %v300 = vadd.f32 %v247, %v294
        %vm301 = vcmask 261120
        %302 = vst.msk [vmem:[%s185] sm:$0xff] %vm301, %v297
        %303 = vst.msk [vmem:[%s185 + $0x8] sm:$0xff] %vm301, %v298
        %304 = vst.msk [vmem:[%s185 + $0x10] sm:$0xff] %vm301, %v299
        %305 = vst.msk [vmem:[%s185 + $0x18] sm:$0xff] %vm301, %v300
        %p306 = scmp.lt.s32.totalorder %s24, 1
        %s307 = scalar_select %p306, %s24, 1
        %s308 = smul.addr %s307, 4
        %s309 = smul.addr %s308, 8
        %s310 = scalar_lea.vmem %s1, %s309
        %s311 = sand.u32 %s94, 1
        %s312 = scalar_lea.sflag [#allocation4], %s311
        %s313 = sand.u32 %s94, 1
        %s314 = smul.addr %s313, 32
        %s315 = scalar_lea.vmem [#allocation5], %s314
        // Predicated region
        $region33: #{tpu_custom_call.1} parent=23 // pred_check
          %p316 = pneg %p78
        $region34: #{tpu_custom_call.1} parent=23 // pred_check_branch
          %318 = sbr.rel (%p316) target = $region36
        $region35: #{tpu_custom_call.1} parent=23 // pred_region
          _
        $region36: #{tpu_custom_call.1} parent=23 // pred_fallthru
          _
        // Predicated region
        $region37: #{tpu_custom_call.1} parent=23 // pred_check
          %p319 = pneg %p104
        $region38: #{tpu_custom_call.1} parent=23 // pred_check_branch
          %321 = sbr.rel (%p319) target = $region40
        $region39: #{tpu_custom_call.1} parent=23 // pred_region
          %s323 = ssub.s32 512, 512
          %324 = vsyncadd %s312, %s323
          %s325 = smul.addr %s24, 4
          %s326 = smul.addr %s325, 128
          %s327 = scalar_lea.hbm %s2, %s326
          %s328 = sshll.u32 %s315, 4
          %s329 = int_to_ptr.vmem [resolvable:$true] %s328
          %334 = dma.vmem_to_hbm [thread:$0]  %s329, 512, %s327, %s312, 128, 128, 8
        $region40: #{tpu_custom_call.1} parent=23 // pred_fallthru
          _
      $region24: #{tpu_custom_call.1} parent=5 // pred_fallthru
        _
      %p335 = scmp.le.s32.totalorder 2, %s15
      // Predicated region
      $region41: #{tpu_custom_call.1} parent=5 // pred_check
        %p336 = pneg %p335
      $region42: #{tpu_custom_call.1} parent=5 // pred_check_branch
        %338 = sbr.rel (%p336) target = $region44
      $region43: #{tpu_custom_call.1} parent=5 // pred_region
        %s339 = ssub.s32 %s15, 2
        // Predicated region
        $region45: #{tpu_custom_call.1} parent=43 // pred_check
          %p340 = pneg %p84
        $region46: #{tpu_custom_call.1} parent=43 // pred_check_branch
          %342 = sbr.rel (%p340) target = $region48
        $region47: #{tpu_custom_call.1} parent=43 // pred_region
          %p343 = scmp.lt.s32.totalorder %s26, 1
          %s344 = scalar_select %p343, %s26, 1
          %s345 = smul.addr %s344, 4
          %s346 = smul.addr %s345, 8
          %s347 = scalar_lea.vmem %s1, %s346
        $region48: #{tpu_custom_call.1} parent=43 // pred_fallthru
          _
        // Predicated region
        $region49: #{tpu_custom_call.1} parent=43 // pred_check
          %p348 = pneg %p110
        $region50: #{tpu_custom_call.1} parent=43 // pred_check_branch
          %350 = sbr.rel (%p348) target = $region52
        $region51: #{tpu_custom_call.1} parent=43 // pred_region
          %s351 = sand.u32 %s95, 1
          %s352 = scalar_lea.sflag [#allocation4], %s351
          %s353 = sand.u32 %s95, 1
          %s354 = smul.addr %s353, 32
          %s355 = scalar_lea.vmem [#allocation5], %s354
          %356 = dma.done %s352, 512
        $region52: #{tpu_custom_call.1} parent=43 // pred_fallthru
          _
      $region44: #{tpu_custom_call.1} parent=5 // pred_fallthru
        _
    $region6: #{tpu_custom_call.1} parent=1 // loop_footer
      %s19 = sadd.s32 1, %s15
    $region7: #{tpu_custom_call.1} parent=1 // loop_footer_branch
      %14 = sbr.rel target = $region3
    $region8: #{tpu_custom_call.1} parent=1 // loop_exit
      _
    %357 = vsyncpa [#allocation3], 1
    %s358 = scalar_lea.sflag [#allocation3], 1
    %359 = vsyncpa %s358, 1
    %360 = vsyncpa [#allocation4], 1
    %s361 = scalar_lea.sflag [#allocation4], 1
    %362 = vsyncpa %s361, 1

</llo_original>
